<compile_context>
chip_gen: v6e
topology: v6e:2x2x1
jax: 0.10.0
libtpu: 0.0.40
codegen_flags: <defaults>
</compile_context>

<pallas_src>
import math

import jax
import jax.numpy as jnp
from jax.experimental import pallas as pl
from jax.experimental.pallas import tpu as pltpu


def _round_up(v, m):
    return ((v + m - 1) // m) * m


def _pick_chunk(L):
    # Largest chunk length that divides L and yields >= 2 chunks, so the VPU
    # MACs of chunk c+1 overlap the MXU matmul of chunk c.  Fall back to one
    # chunk for short sequences.
    for cl in (512, 256, 128, 64, 32, 16, 8):
        if L % cl == 0 and L // cl >= 2:
            return cl
    return L


def _make_sepconv_kernel(L, k, PF, CL):
    pad = k // 2
    n_chunks = L // CL

    def kernel(x_hbm, wdw_ref, wpw_ref, bias_ref, o_ref, xpad_ref, dma_sem):
        # x_hbm   : (B, L, C_in_p) raw HBM ref (manual DMA)
        # wdw_ref : (k, C_in_p)          depthwise weights, compute dtype
        # wpw_ref : (C_in_p, C_out_p)    pointwise weights, compute dtype
        # bias_ref: (1, C_out_p) f32
        # o_ref   : (1, L, C_out_p)
        # xpad_ref: (2, PF + L + pad, C_in_p) 2-slot slab; rows [PF, PF+L) hold x
        # dma_sem : (2,) DMA semaphores
        b = pl.program_id(0)
        nb = pl.num_programs(0)
        slot = b % 2
        C_in_p = xpad_ref.shape[-1]

        def x_dma(batch_idx, s):
            return pltpu.make_async_copy(
                x_hbm.at[batch_idx],
                xpad_ref.at[s, PF:PF + L, :],
                dma_sem.at[s])

        @pl.when(b == 0)
        def _():
            # Zero only the halo rows (the DMA never touches them), once.
            for s in range(2):
                xpad_ref[s, :PF, :] = jnp.zeros((PF, C_in_p), xpad_ref.dtype)
                if pad > 0:
                    xpad_ref[s, PF + L:PF + L + pad, :] = jnp.zeros(
                        (pad, C_in_p), xpad_ref.dtype)
            x_dma(0, 0).start()          # prime slot 0 with batch 0

        # Wait for this batch's slab, then immediately prefetch the next batch
        # into the other slot (overlaps HBM fetch with this batch's compute).
        x_dma(b, slot).wait()

        @pl.when(b + 1 < nb)
        def _():
            x_dma(b + 1, 1 - slot).start()

        bias_v = bias_ref[...]           # (1, C_out_p) f32, hoisted out of loop

        for c in range(n_chunks):        # static unroll; chunks are independent
            start0 = PF - pad + c * CL
            # Depthwise: k shifted multiply-adds on the VPU.  Slab already holds
            # the compute dtype -> no per-tap cast.
            acc = xpad_ref[slot, start0:start0 + CL, :] * wdw_ref[0:1, :]
            for j in range(1, k):
                acc = acc + (xpad_ref[slot, start0 + j:start0 + j + CL, :]
                             * wdw_ref[j:j + 1, :])
            # Pointwise 1x1 conv == (CL, C_in) @ (C_in, C_out) on the MXU with
            # f32 accumulation.
            out_c = jnp.dot(acc, wpw_ref[...],
                            preferred_element_type=jnp.float32)
            out_c = out_c + bias_v
            o_ref[0, c * CL:(c + 1) * CL, :] = out_c.astype(o_ref.dtype)

    return kernel


def separable_conv1d(x, w_depthwise, w_pointwise, bias, kernel_size):
    """x: (B, L, C_in); w_depthwise: (C_in, 1, k) [torch layout];
    w_pointwise: (C_out, C_in, 1) [torch layout]; bias: (C_out,) or None.

    Note: only odd kernel_size is supported (PyTorch padding=k//2 keeps L)."""
    B, L, C_in = x.shape
    C_out = w_pointwise.shape[0]
    k = int(kernel_size)
    if k % 2 != 1:
        raise NotImplementedError("SeparableConv1d kernel supports odd kernel_size only")
    pad = k // 2

    # Compute dtype keyed on the activation dtype only (review correctness note).
    compute_dtype = jnp.bfloat16 if x.dtype == jnp.bfloat16 else jnp.float32

    # Lane-dense channel padding (no-op at real ConvBERT sizes, C = 768).
    C_in_p = _round_up(C_in, 128)
    C_out_p = _round_up(C_out, 128)

    x_p = x if C_in_p == C_in else jnp.pad(x, ((0, 0), (0, 0), (0, C_in_p - C_in)))
    x_p = x_p.astype(compute_dtype)

    wdw = jnp.transpose(w_depthwise[:, 0, :], (1, 0)).astype(compute_dtype)   # (k, C_in)
    wdw = jnp.pad(wdw, ((0, 0), (0, C_in_p - C_in)))                          # (k, C_in_p)
    wpw = jnp.transpose(w_pointwise[:, :, 0], (1, 0)).astype(compute_dtype)   # (C_in, C_out)
    wpw = jnp.pad(wpw, ((0, C_in_p - C_in), (0, C_out_p - C_out)))            # (C_in_p, C_out_p)
    if bias is None:
        bias_arr = jnp.zeros((1, C_out_p), jnp.float32)
    else:
        bias_arr = jnp.pad(bias.astype(jnp.float32).reshape(1, C_out),
                           ((0, 0), (0, C_out_p - C_out)))

    PF = _round_up(max(pad, 1), 8)        # 8-aligned DMA destination row offset
    CL = _pick_chunk(L)
    slab_rows = PF + L + pad

    csize = jnp.dtype(compute_dtype).itemsize
    osize = jnp.dtype(x.dtype).itemsize
    vmem_needed = (
        2 * slab_rows * C_in_p * csize          # x slab (2-slot)
        + 2 * L * C_out_p * osize               # output block (double-buffered)
        + 2 * k * C_in_p * csize                # depthwise weights
        + 2 * C_in_p * C_out_p * csize          # pointwise weights
        + 2 * C_out_p * 4)                      # bias
    vmem_limit = int(min(max(2 * vmem_needed, 32 << 20), 96 << 20))

    cost = pl.CostEstimate(
        flops=2 * B * L * C_in_p * (C_out_p + k),
        transcendentals=0,
        bytes_accessed=int(x_p.size * csize + wdw.size * csize
                           + wpw.size * csize + bias_arr.size * 4
                           + B * L * C_out_p * osize),
    )

    kernel = _make_sepconv_kernel(L, k, PF, CL)

    out = pl.pallas_call(
        kernel,
        out_shape=jax.ShapeDtypeStruct((B, L, C_out_p), x.dtype),
        grid_spec=pltpu.PrefetchScalarGridSpec(
            num_scalar_prefetch=0,
            grid=(B,),
            in_specs=[
                pl.BlockSpec(memory_space=pl.ANY),               # x stays in HBM
                pl.BlockSpec((k, C_in_p), lambda b: (0, 0)),
                pl.BlockSpec((C_in_p, C_out_p), lambda b: (0, 0)),
                pl.BlockSpec((1, C_out_p), lambda b: (0, 0)),
            ],
            out_specs=pl.BlockSpec((1, L, C_out_p), lambda b: (b, 0, 0)),
            scratch_shapes=[
                pltpu.VMEM((2, slab_rows, C_in_p), compute_dtype),
                pltpu.SemaphoreType.DMA((2,)),
            ],
        ),
        compiler_params=pltpu.CompilerParams(
            # The cross-grid-step DMA prefetch chain (batch b issues b+1's DMA)
            # requires sequential traversal of the batch axis.
            dimension_semantics=("arbitrary",),
            vmem_limit_bytes=vmem_limit,
        ),
        cost_estimate=cost,
    )(x_p, wdw, wpw, bias_arr)

    return out[:, :, :C_out] if C_out_p != C_out else out


def _reference(x, w_depthwise, w_pointwise, bias, k):
    # Pure-JAX f32 reference mirroring the PyTorch module.
    B, L, C_in = x.shape
    pad = k // 2
    x_pad = jnp.pad(x.astype(jnp.float32), ((0, 0), (pad, pad), (0, 0)))
    dw = jnp.zeros((B, L, C_in), jnp.float32)
    for j in range(k):
        dw = dw + x_pad[:, j:j + L, :] * w_depthwise[:, 0, j].astype(jnp.float32)[None, None, :]
    out = jnp.einsum("blc,oc->blo", dw, w_pointwise[:, :, 0].astype(jnp.float32))
    if bias is not None:
        out = out + bias.astype(jnp.float32)[None, None, :]
    return out


def _kaiming_normal(key, shape, fan_in):
    std = math.sqrt(2.0 / fan_in)
    return std * jax.random.normal(key, shape, dtype=jnp.float32)


if __name__ == "__main__":
    B, L, C_in, C_out, K = 2, 8, 4, 8, 3

    key = jax.random.PRNGKey(0)
    kx, kdw, kpw = jax.random.split(key, 3)

    x = jax.random.normal(kx, (B, L, C_in), dtype=jnp.float32)
    # torch nn.Conv1d weight layouts:
    #   depthwise: (in_ch, in_ch // groups = 1, k), kaiming fan_in = 1 * k
    #   pointwise: (out_ch, in_ch, 1),             kaiming fan_in = in_ch * 1
    w_dw = _kaiming_normal(kdw, (C_in, 1, K), fan_in=1 * K)
    w_pw = _kaiming_normal(kpw, (C_out, C_in, 1), fan_in=C_in * 1)
    bias = jnp.zeros((C_out,), jnp.float32)  # nn.Parameter(torch.zeros(out_ch))

    ref = _reference(x, w_dw, w_pw, bias, K)

    # f32 path (matches the f32 reference tightly).
    out_f32 = jax.block_until_ready(separable_conv1d(x, w_dw, w_pw, bias, K))
    assert out_f32.shape == (B, L, C_out)
    assert jnp.allclose(out_f32, ref, atol=1e-5, rtol=1e-5)

    # bf16 path (native bf16 depthwise MACs + bf16 MXU feed); looser tolerance.
    out_bf16 = jax.block_until_ready(
        separable_conv1d(x.astype(jnp.bfloat16),
                         w_dw.astype(jnp.bfloat16),
                         w_pw.astype(jnp.bfloat16),
                         bias.astype(jnp.bfloat16), K))
    assert out_bf16.shape == (B, L, C_out)
    assert out_bf16.dtype == jnp.bfloat16
    assert jnp.allclose(out_bf16.astype(jnp.float32), ref, atol=1e-1, rtol=5e-2)

    print("KERNEL_OK")
</pallas_src>

<mosaic_0001>
module attributes {stable_mosaic.version = 11 : i64} {
  func.func @kernel(%arg0: i32, %arg1: memref<2x8x128xf32, #tpu.memory_space<any>>, %arg2: memref<3x128xf32, #tpu.memory_space<vmem>>, %arg3: memref<128x128xf32, #tpu.memory_space<vmem>>, %arg4: memref<1x128xf32, #tpu.memory_space<vmem>>, %arg5: memref<1x8x128xf32, #tpu.memory_space<vmem>>, %arg6: memref<2x17x128xf32, #tpu.memory_space<vmem>>, %arg7: memref<2x!tpu.dma_semaphore, #tpu.memory_space<semaphore_mem>>) attributes {dimension_semantics = [#tpu.dimension_semantics<arbitrary>], iteration_bounds = array<i64: 2>, scalar_prefetch = 0 : i64, scratch_operands = 2 : i64, tpu.core_type = #tpu.core_type<tc>, window_params = [{}, {pipeline_mode = #tpu.pipeline_mode<synchronous>, transform_indices = @transform_1, window_bounds = array<i64: 3, 128>}, {pipeline_mode = #tpu.pipeline_mode<synchronous>, transform_indices = @transform_2, window_bounds = array<i64: 128, 128>}, {pipeline_mode = #tpu.pipeline_mode<synchronous>, transform_indices = @transform_3, window_bounds = array<i64: 1, 128>}, {transform_indices = @transform_4, window_bounds = array<i64: 1, 8, 128>}]} {
    %c2_i32 = arith.constant 2 : i32
    %c0_i32 = arith.constant 0 : i32
    %0 = arith.cmpi eq, %c2_i32, %c0_i32 : i32
    %c1_i32 = arith.constant 1 : i32
    %1 = arith.select %0, %c1_i32, %c2_i32 : i32
    %2 = arith.remsi %arg0, %1 : i32
    %c0_i32_0 = arith.constant 0 : i32
    %3 = arith.cmpi ne, %2, %c0_i32_0 : i32
    %c0_i32_1 = arith.constant 0 : i32
    %4 = arith.cmpi slt, %2, %c0_i32_1 : i32
    %c0_i32_2 = arith.constant 0 : i32
    %5 = arith.cmpi slt, %1, %c0_i32_2 : i32
    %6 = arith.xori %4, %5 : i1
    %7 = arith.andi %6, %3 : i1
    %8 = arith.addi %2, %1 : i32
    %9 = arith.select %7, %8, %2 : i32
    %c0_i32_3 = arith.constant 0 : i32
    %10 = arith.cmpi eq, %arg0, %c0_i32_3 : i32
    %11 = arith.extui %10 : i1 to i32
    %c0_i32_4 = arith.constant 0 : i32
    %12 = arith.cmpi ne, %11, %c0_i32_4 : i32
    scf.if %12 {
      %cst_24 = arith.constant 0.000000e+00 : f32
      %51 = vector.broadcast %cst_24 : f32 to vector<8x128xf32>
      %c0_25 = arith.constant 0 : index
      %c0_26 = arith.constant 0 : index
      %c0_27 = arith.constant 0 : index
      %52 = vector.load %arg6[%c0_25, %c0_26, %c0_27] : memref<2x17x128xf32, #tpu.memory_space<vmem>>, vector<1x8x128xf32>
      %53 = vector.shape_cast %52 : vector<1x8x128xf32> to vector<8x128xf32>
      %54 = vector.shape_cast %51 : vector<8x128xf32> to vector<1x8x128xf32>
      tpu.vector_store %arg6[%c0_25, %c0_26, %c0_27], %54 {strides = array<i32>} : memref<2x17x128xf32, #tpu.memory_space<vmem>>, vector<1x8x128xf32>,
      %cst_28 = arith.constant 0.000000e+00 : f32
      %55 = vector.broadcast %cst_28 : f32 to vector<1x128xf32>
      %c0_29 = arith.constant 0 : index
      %c16 = arith.constant 16 : index
      %c0_30 = arith.constant 0 : index
      %56 = vector.load %arg6[%c0_29, %c16, %c0_30] : memref<2x17x128xf32, #tpu.memory_space<vmem>>, vector<1x1x128xf32>
      %57 = vector.shape_cast %56 : vector<1x1x128xf32> to vector<1x128xf32>
      %58 = vector.shape_cast %55 : vector<1x128xf32> to vector<1x1x128xf32>
      tpu.vector_store %arg6[%c0_29, %c16, %c0_30], %58 {strides = array<i32>} : memref<2x17x128xf32, #tpu.memory_space<vmem>>, vector<1x1x128xf32>,
      %cst_31 = arith.constant 0.000000e+00 : f32
      %59 = vector.broadcast %cst_31 : f32 to vector<8x128xf32>
      %c1_32 = arith.constant 1 : index
      %c0_33 = arith.constant 0 : index
      %c0_34 = arith.constant 0 : index
      %60 = vector.load %arg6[%c1_32, %c0_33, %c0_34] : memref<2x17x128xf32, #tpu.memory_space<vmem>>, vector<1x8x128xf32>
      %61 = vector.shape_cast %60 : vector<1x8x128xf32> to vector<8x128xf32>
      %62 = vector.shape_cast %59 : vector<8x128xf32> to vector<1x8x128xf32>
      tpu.vector_store %arg6[%c1_32, %c0_33, %c0_34], %62 {strides = array<i32>} : memref<2x17x128xf32, #tpu.memory_space<vmem>>, vector<1x8x128xf32>,
      %cst_35 = arith.constant 0.000000e+00 : f32
      %63 = vector.broadcast %cst_35 : f32 to vector<1x128xf32>
      %c1_36 = arith.constant 1 : index
      %c16_37 = arith.constant 16 : index
      %c0_38 = arith.constant 0 : index
      %64 = vector.load %arg6[%c1_36, %c16_37, %c0_38] : memref<2x17x128xf32, #tpu.memory_space<vmem>>, vector<1x1x128xf32>
      %65 = vector.shape_cast %64 : vector<1x1x128xf32> to vector<1x128xf32>
      %66 = vector.shape_cast %63 : vector<1x128xf32> to vector<1x1x128xf32>
      tpu.vector_store %arg6[%c1_36, %c16_37, %c0_38], %66 {strides = array<i32>} : memref<2x17x128xf32, #tpu.memory_space<vmem>>, vector<1x1x128xf32>,
      %c0_i32_39 = arith.constant 0 : i32
      %c0_i32_40 = arith.constant 0 : i32
      %c0_i32_41 = arith.constant 0 : i32
      %c0_i32_42 = arith.constant 0 : i32
      %c0_i32_43 = arith.constant 0 : i32
      %67 = tpu.memref_slice %arg1[%c0_i32_39, %c0_i32_42, %c0_i32_43] : memref<2x8x128xf32, #tpu.memory_space<any>> -> memref<1x8x128xf32, #tpu.memory_space<any>>
      %68 = tpu.memref_squeeze %67 : memref<1x8x128xf32, #tpu.memory_space<any>> -> memref<8x128xf32, #tpu.memory_space<any>>
      %c8_i32_44 = arith.constant 8 : i32
      %c0_i32_45 = arith.constant 0 : i32
      %69 = tpu.memref_slice %arg6[%c0_i32_40, %c8_i32_44, %c0_i32_45] : memref<2x17x128xf32, #tpu.memory_space<vmem>> -> memref<1x8x128xf32, #tpu.memory_space<vmem>>
      %70 = tpu.memref_squeeze %69 : memref<1x8x128xf32, #tpu.memory_space<vmem>> -> memref<8x128xf32, #tpu.memory_space<vmem>>
      %71 = tpu.memref_slice %arg7[%c0_i32_41] : memref<2x!tpu.dma_semaphore, #tpu.memory_space<semaphore_mem>> -> memref<1x!tpu.dma_semaphore, #tpu.memory_space<semaphore_mem>>
      %72 = tpu.memref_squeeze %71 : memref<1x!tpu.dma_semaphore, #tpu.memory_space<semaphore_mem>> -> memref<!tpu.dma_semaphore, #tpu.memory_space<semaphore_mem>>
      tpu.enqueue_dma source(%68 : memref<8x128xf32, #tpu.memory_space<any>>) target(%70 : memref<8x128xf32, #tpu.memory_space<vmem>>) target_semaphore(%72 : memref<!tpu.dma_semaphore, #tpu.memory_space<semaphore_mem>>)
    } else {
    }
    %c0_i32_5 = arith.constant 0 : i32
    %c0_i32_6 = arith.constant 0 : i32
    %13 = tpu.memref_slice %arg1[%arg0, %c0_i32_5, %c0_i32_6] : memref<2x8x128xf32, #tpu.memory_space<any>> -> memref<1x8x128xf32, #tpu.memory_space<any>>
    %14 = tpu.memref_squeeze %13 : memref<1x8x128xf32, #tpu.memory_space<any>> -> memref<8x128xf32, #tpu.memory_space<any>>
    %c8_i32 = arith.constant 8 : i32
    %c0_i32_7 = arith.constant 0 : i32
    %15 = tpu.memref_slice %arg6[%9, %c8_i32, %c0_i32_7] : memref<2x17x128xf32, #tpu.memory_space<vmem>> -> memref<1x8x128xf32, #tpu.memory_space<vmem>>
    %16 = tpu.memref_squeeze %15 : memref<1x8x128xf32, #tpu.memory_space<vmem>> -> memref<8x128xf32, #tpu.memory_space<vmem>>
    %17 = tpu.memref_slice %arg7[%9] : memref<2x!tpu.dma_semaphore, #tpu.memory_space<semaphore_mem>> -> memref<1x!tpu.dma_semaphore, #tpu.memory_space<semaphore_mem>>
    %18 = tpu.memref_squeeze %17 : memref<1x!tpu.dma_semaphore, #tpu.memory_space<semaphore_mem>> -> memref<!tpu.dma_semaphore, #tpu.memory_space<semaphore_mem>>
    tpu.wait_dma2 semaphore(%18 : memref<!tpu.dma_semaphore, #tpu.memory_space<semaphore_mem>>) src(%14 : memref<8x128xf32, #tpu.memory_space<any>>) dst(%16 : memref<8x128xf32, #tpu.memory_space<vmem>>)
    %c1_i32_8 = arith.constant 1 : i32
    %19 = arith.addi %arg0, %c1_i32_8 : i32
    %c2_i32_9 = arith.constant 2 : i32
    %20 = arith.cmpi slt, %19, %c2_i32_9 : i32
    %21 = arith.extui %20 : i1 to i32
    %c0_i32_10 = arith.constant 0 : i32
    %22 = arith.cmpi ne, %21, %c0_i32_10 : i32
    scf.if %22 {
      %c1_i32_24 = arith.constant 1 : i32
      %51 = arith.addi %arg0, %c1_i32_24 : i32
      %c1_i32_25 = arith.constant 1 : i32
      %52 = arith.subi %c1_i32_25, %9 : i32
      %c0_i32_26 = arith.constant 0 : i32
      %c0_i32_27 = arith.constant 0 : i32
      %53 = tpu.memref_slice %arg1[%51, %c0_i32_26, %c0_i32_27] : memref<2x8x128xf32, #tpu.memory_space<any>> -> memref<1x8x128xf32, #tpu.memory_space<any>>
      %54 = tpu.memref_squeeze %53 : memref<1x8x128xf32, #tpu.memory_space<any>> -> memref<8x128xf32, #tpu.memory_space<any>>
      %c8_i32_28 = arith.constant 8 : i32
      %c0_i32_29 = arith.constant 0 : i32
      %55 = tpu.memref_slice %arg6[%52, %c8_i32_28, %c0_i32_29] : memref<2x17x128xf32, #tpu.memory_space<vmem>> -> memref<1x8x128xf32, #tpu.memory_space<vmem>>
      %56 = tpu.memref_squeeze %55 : memref<1x8x128xf32, #tpu.memory_space<vmem>> -> memref<8x128xf32, #tpu.memory_space<vmem>>
      %57 = tpu.memref_slice %arg7[%52] : memref<2x!tpu.dma_semaphore, #tpu.memory_space<semaphore_mem>> -> memref<1x!tpu.dma_semaphore, #tpu.memory_space<semaphore_mem>>
      %58 = tpu.memref_squeeze %57 : memref<1x!tpu.dma_semaphore, #tpu.memory_space<semaphore_mem>> -> memref<!tpu.dma_semaphore, #tpu.memory_space<semaphore_mem>>
      tpu.enqueue_dma source(%54 : memref<8x128xf32, #tpu.memory_space<any>>) target(%56 : memref<8x128xf32, #tpu.memory_space<vmem>>) target_semaphore(%58 : memref<!tpu.dma_semaphore, #tpu.memory_space<semaphore_mem>>)
    } else {
    }
    %c0 = arith.constant 0 : index
    %c0_11 = arith.constant 0 : index
    %23 = vector.load %arg4[%c0, %c0_11] : memref<1x128xf32, #tpu.memory_space<vmem>>, vector<1x128xf32>
    %24 = arith.index_cast %9 : i32 to index
    %c7 = arith.constant 7 : index
    %c0_12 = arith.constant 0 : index
    %25 = vector.load %arg6[%24, %c7, %c0_12] : memref<2x17x128xf32, #tpu.memory_space<vmem>>, vector<1x8x128xf32>
    %26 = vector.shape_cast %25 : vector<1x8x128xf32> to vector<8x128xf32>
    %c0_13 = arith.constant 0 : index
    %c0_14 = arith.constant 0 : index
    %27 = vector.load %arg2[%c0_13, %c0_14] : memref<3x128xf32, #tpu.memory_space<vmem>>, vector<1x128xf32>
    %28 = vector.broadcast %27 : vector<1x128xf32> to vector<8x128xf32>
    %29 = arith.mulf %26, %28 : vector<8x128xf32>
    %30 = arith.index_cast %9 : i32 to index
    %c8 = arith.constant 8 : index
    %c0_15 = arith.constant 0 : index
    %31 = vector.load %arg6[%30, %c8, %c0_15] : memref<2x17x128xf32, #tpu.memory_space<vmem>>, vector<1x8x128xf32>
    %32 = vector.shape_cast %31 : vector<1x8x128xf32> to vector<8x128xf32>
    %c1 = arith.constant 1 : index
    %c0_16 = arith.constant 0 : index
    %33 = vector.load %arg2[%c1, %c0_16] : memref<3x128xf32, #tpu.memory_space<vmem>>, vector<1x128xf32>
    %34 = vector.broadcast %33 : vector<1x128xf32> to vector<8x128xf32>
    %35 = arith.mulf %32, %34 : vector<8x128xf32>
    %36 = arith.addf %29, %35 : vector<8x128xf32>
    %37 = arith.index_cast %9 : i32 to index
    %c9 = arith.constant 9 : index
    %c0_17 = arith.constant 0 : index
    %38 = vector.load %arg6[%37, %c9, %c0_17] : memref<2x17x128xf32, #tpu.memory_space<vmem>>, vector<1x8x128xf32>
    %39 = vector.shape_cast %38 : vector<1x8x128xf32> to vector<8x128xf32>
    %c2 = arith.constant 2 : index
    %c0_18 = arith.constant 0 : index
    %40 = vector.load %arg2[%c2, %c0_18] : memref<3x128xf32, #tpu.memory_space<vmem>>, vector<1x128xf32>
    %41 = vector.broadcast %40 : vector<1x128xf32> to vector<8x128xf32>
    %42 = arith.mulf %39, %41 : vector<8x128xf32>
    %43 = arith.addf %36, %42 : vector<8x128xf32>
    %c0_19 = arith.constant 0 : index
    %c0_20 = arith.constant 0 : index
    %44 = vector.load %arg3[%c0_19, %c0_20] : memref<128x128xf32, #tpu.memory_space<vmem>>, vector<128x128xf32>
    %cst = arith.constant dense<0.000000e+00> : vector<8x128xf32>
    %45 = tpu.matmul %43, %44, %cst {dimension_numbers = #tpu.dot_dimension_numbers<[1], [0], [0], [1], [0, 0, 1, 1], [], []>} : vector<8x128xf32>, vector<128x128xf32>, vector<8x128xf32> -> vector<8x128xf32>
    %46 = vector.broadcast %23 : vector<1x128xf32> to vector<8x128xf32>
    %47 = arith.addf %45, %46 : vector<8x128xf32>
    %c0_21 = arith.constant 0 : index
    %c0_22 = arith.constant 0 : index
    %c0_23 = arith.constant 0 : index
    %48 = vector.load %arg5[%c0_21, %c0_22, %c0_23] : memref<1x8x128xf32, #tpu.memory_space<vmem>>, vector<1x8x128xf32>
    %49 = vector.shape_cast %48 : vector<1x8x128xf32> to vector<8x128xf32>
    %50 = vector.shape_cast %47 : vector<8x128xf32> to vector<1x8x128xf32>
    tpu.vector_store %arg5[%c0_21, %c0_22, %c0_23], %50 {strides = array<i32>} : memref<1x8x128xf32, #tpu.memory_space<vmem>>, vector<1x8x128xf32>,
    return
  }
  func.func @transform_1(%arg0: i32) -> (i32, i32) {
    %c0_i32 = arith.constant 0 : i32
    %c0_i32_0 = arith.constant 0 : i32
    %c0_i32_1 = arith.constant 0 : i32
    return %c0_i32, %c0_i32_0 : i32, i32
  }
  func.func @transform_2(%arg0: i32) -> (i32, i32) {
    %c0_i32 = arith.constant 0 : i32
    %c0_i32_0 = arith.constant 0 : i32
    %c0_i32_1 = arith.constant 0 : i32
    return %c0_i32, %c0_i32_0 : i32, i32
  }
  func.func @transform_3(%arg0: i32) -> (i32, i32) {
    %c0_i32 = arith.constant 0 : i32
    %c0_i32_0 = arith.constant 0 : i32
    %c0_i32_1 = arith.constant 0 : i32
    return %c0_i32, %c0_i32_0 : i32, i32
  }
  func.func @transform_4(%arg0: i32) -> (i32, i32, i32) {
    %c0_i32 = arith.constant 0 : i32
    %c0_i32_0 = arith.constant 0 : i32
    %c0_i32_1 = arith.constant 0 : i32
    return %arg0, %c0_i32, %c0_i32_0 : i32, i32, i32
  }
}

</mosaic_0001>

<llo_original>
// kernel: tpu_custom_call.1
$region0: #{tpu_custom_call.1}
  #allocation0 [shape = 'u32[]', space=smem, size = 0x4, offset = 0x4, fixed_abs, tag = 'smem constant byte address 0x4 - core index']
  #allocation1 [shape = 'u32[144,128]{1,0:T(1,128)}', space=vmem, size = 0x12000, scoped, tag = 'internal scratch']
  #allocation2 [shape = 'f32[2,17,128]{2,1,0:T(8,128)}', space=vmem, size = 0x6000, scoped, tag = 'scratch operand']
  #allocation3 [shape = 's32[2]{0}', space=sflag, size = 0x8, scoped, tag = 'scratch operand']
  #allocation10 [shape = 's32[]', space=sflag, size = 0x4, offset = 0, fixed_abs, tag = 'sflag constant byte address 0x0 - dummy sync flag']
  #allocation11 [shape = 's32[]', space=sflag, size = 0x4, offset = 0, fixed_abs, tag = 'sflag constant byte address 0x0 - dummy sync flag']
  #allocation12 [shape = 'u32[]', space=smem, size = 0x4, offset = 0x44, fixed_abs, tag = 'smem constant byte address 0x44 - assertion arg 0']
  #allocation13 [shape = 'u32[]', space=smem, size = 0x4, offset = 0x48, fixed_abs, tag = 'smem constant byte address 0x48 - assertion arg 1']
  #allocation14 [shape = 's32[]', space=sflag, size = 0x4, offset = 0, fixed_abs, tag = 'sflag constant byte address 0x0 - dummy sync flag']
  #allocation15 [shape = 's32[]', space=sflag, size = 0x4, offset = 0, fixed_abs, tag = 'sflag constant byte address 0x0 - dummy sync flag']
  %s0 = inlined_call_operand.hbm [shape: f32[2,8,128], index: 0, kind: input, shape index: {}]
  %s1 = inlined_call_operand.hbm [shape: f32[3,128], index: 1, kind: input, shape index: {}]
  %s2 = inlined_call_operand.hbm [shape: f32[128,128], index: 2, kind: input, shape index: {}]
  %s3 = inlined_call_operand.vmem [shape: f32[1,128], index: 3, kind: input, shape index: {}]
  %s4 = inlined_call_operand.hbm [shape: f32[2,8,128], index: 4, kind: output, shape index: {}]
  %s5 = sld [smem:[#allocation0]]
  $region69: #{tpu_custom_call.1} parent=0
    _
  %s7 = ssub.s32 1, %s5
  %s8 = scalar_select 0, %s7, %s5
  $region1: #{tpu_custom_call.1} parent=0
    #allocation4 [shape = 'u8[2048]{0}', space=vmem, size = 0x800, scoped, tag = 'input window, operand 1, single buffered']
    #allocation5 [shape = 's32[2]{0}', space=sflag, size = 0x8, scoped, tag = 'scoped memory for tpu_custom_call.1']
    #allocation6 [shape = 's32[2]{0}', space=sflag, size = 0x8, scoped, tag = 'scoped memory for tpu_custom_call.1']
    #allocation7 [shape = 'u8[65536]{0}', space=vmem, size = 0x10000, scoped, tag = 'input window, operand 2, single buffered']
    #allocation8 [shape = 's32[1]{0}', space=sflag, size = 0x4, scoped, tag = 'scoped memory for tpu_custom_call.1']
    #allocation9 [shape = 'u8[8192]{0}', space=vmem, size = 0x2000, scoped, tag = 'output window, operand 0']
    %9 = vsyncpa [#allocation5], 0
    %10 = vsyncpa [#allocation8], 0
    %11 = vsyncpa [#allocation6], 0
    %s12 = scalar_lea.sflag [#allocation6], 1
    %13 = vsyncpa %s12, 0
    loop: start=0, step=1, limit=4
    $region2: #{tpu_custom_call.1} parent=1 // loop_pre_header
      _
    $region3: #{tpu_custom_call.1} parent=1 // loop_header
      %s15 = sphi 0, %s19
      %p16 = scmp.ge.s32.totalorder %s15, 4
      %s23 = sphi 0, %s23
      %s25 = sphi 0, %s23
      %s26 = sphi 0, %s25
      %s40 = sphi 0, %s26
      %s44 = sphi 0, %s44
      %s46 = sphi 0, %s44
      %s47 = sphi 0, %s46
      %s61 = sphi 0, %s47
      %s65 = sphi 0, %s65
      %s67 = sphi 0, %s65
      %s68 = sphi 0, %s67
      %s82 = sphi 0, %s68
      %s88 = sphi 0, %s90
      %s91 = sphi 0, %s88
      %s92 = sphi 0, %s91
      %s108 = sphi 0, %s92
    $region4: #{tpu_custom_call.1} parent=1 // loop_header_branch
      %18 = sbr.rel (%p16) target = $region8
    $region5: #{tpu_custom_call.1} parent=1 // loop_body
      %s20 = ssub.s32 %s15, 1
      %s21 = ssub.s32 %s15, 2
      %s22 = sadd.s32 %s15, 1
      %s24 = sadd.s32 %s23, 1
      %p27 = scmp.eq.s32.totalorder %s15, 1
      %p28 = scmp.ne.s32.totalorder %s23, %s25
      %p29 = scmp.eq.s32.totalorder %s15, 0
      %p30 = por %p28, %p29
      %p31 = scmp.ne.s32.totalorder %s23, %s25
      %p32 = scmp.eq.s32.totalorder %s20, 1
      %p33 = por %p31, %p32
      %p34 = scmp.ne.s32.totalorder %s25, %s26
      %p35 = scmp.eq.s32.totalorder %s20, 0
      %p36 = por %p34, %p35
      %p37 = scmp.ne.s32.totalorder %s25, %s26
      %p38 = scmp.eq.s32.totalorder %s21, 1
      %p39 = por %p37, %p38
      %p41 = scmp.ne.s32.totalorder %s26, %s40
      %p42 = scmp.eq.s32.totalorder %s21, 0
      %p43 = por %p41, %p42
      %s45 = sadd.s32 %s44, 1
      %p48 = scmp.eq.s32.totalorder %s15, 1
      %p49 = scmp.ne.s32.totalorder %s44, %s46
      %p50 = scmp.eq.s32.totalorder %s15, 0
      %p51 = por %p49, %p50
      %p52 = scmp.ne.s32.totalorder %s44, %s46
      %p53 = scmp.eq.s32.totalorder %s20, 1
      %p54 = por %p52, %p53
      %p55 = scmp.ne.s32.totalorder %s46, %s47
      %p56 = scmp.eq.s32.totalorder %s20, 0
      %p57 = por %p55, %p56
      %p58 = scmp.ne.s32.totalorder %s46, %s47
      %p59 = scmp.eq.s32.totalorder %s21, 1
      %p60 = por %p58, %p59
      %p62 = scmp.ne.s32.totalorder %s47, %s61
      %p63 = scmp.eq.s32.totalorder %s21, 0
      %p64 = por %p62, %p63
      %s66 = sadd.s32 %s65, 1
      %p69 = scmp.eq.s32.totalorder %s15, 1
      %p70 = scmp.ne.s32.totalorder %s65, %s67
      %p71 = scmp.eq.s32.totalorder %s15, 0
      %p72 = por %p70, %p71
      %p73 = scmp.ne.s32.totalorder %s65, %s67
      %p74 = scmp.eq.s32.totalorder %s20, 1
      %p75 = por %p73, %p74
      %p76 = scmp.ne.s32.totalorder %s67, %s68
      %p77 = scmp.eq.s32.totalorder %s20, 0
      %p78 = por %p76, %p77
      %p79 = scmp.ne.s32.totalorder %s67, %s68
      %p80 = scmp.eq.s32.totalorder %s21, 1
      %p81 = por %p79, %p80
      %p83 = scmp.ne.s32.totalorder %s68, %s82
      %p84 = scmp.eq.s32.totalorder %s21, 0
      %p85 = por %p83, %p84
      %s86 = ssub.s32 %s15, %s22
      %p87 = scmp.eq.s32.totalorder %s86, 0
      %s89 = sadd.s32 %s88, 1
      %s90 = scalar_select %p87, %s88, %s89
      %p93 = pneg %p87
      %p94 = scmp.eq.s32.totalorder %s15, 1
      %p95 = por %p93, %p94
      %p96 = scmp.ne.s32.totalorder %s88, %s91
      %p97 = scmp.eq.s32.totalorder %s15, 0
      %p98 = por %p96, %p97
      %p99 = scmp.ne.s32.totalorder %s88, %s91
      %p100 = scmp.eq.s32.totalorder %s20, 1
      %p101 = por %p99, %p100
      %p102 = scmp.ne.s32.totalorder %s91, %s92
      %p103 = scmp.eq.s32.totalorder %s20, 0
      %p104 = por %p102, %p103
      %p105 = scmp.ne.s32.totalorder %s91, %s92
      %p106 = scmp.eq.s32.totalorder %s21, 1
      %p107 = por %p105, %p106
      %p109 = scmp.ne.s32.totalorder %s92, %s108
      %p110 = scmp.eq.s32.totalorder %s21, 0
      %p111 = por %p109, %p110
      %p112 = scmp.le.s32.totalorder 1, %s15
      %p113 = scmp.lt.s32.totalorder %s15, 3
      %p114 = pnand %p112, %p113
      %p115 = pneg %p114
      // Predicated region
      $region9: #{tpu_custom_call.1} parent=5 // pred_check
        _
      $region10: #{tpu_custom_call.1} parent=5 // pred_check_branch
        %117 = sbr.rel (%p114) target = $region12
      $region11: #{tpu_custom_call.1} parent=5 // pred_region
        %s118 = ssub.s32 %s15, 1
        // Predicated region
        $region13: #{tpu_custom_call.1} parent=11 // pred_check
          %p119 = pneg %p36
        $region14: #{tpu_custom_call.1} parent=11 // pred_check_branch
          %121 = sbr.rel (%p119) target = $region16
        $region15: #{tpu_custom_call.1} parent=11 // pred_region
          %s123 = ssub.s32 64, 64
          %124 = vsyncadd [#allocation5], %s123
          %s126 = sshll.u32 [#allocation4], 4
          %s127 = int_to_ptr.vmem [resolvable:$true] %s126
          %129 = dma.hbm_to_vmem [thread:$0]  %s1, 64, %s127, [#allocation5]
        $region16: #{tpu_custom_call.1} parent=11 // pred_fallthru
          _
        // Predicated region
        $region17: #{tpu_custom_call.1} parent=11 // pred_check
          %p130 = pneg %p57
        $region18: #{tpu_custom_call.1} parent=11 // pred_check_branch
          %132 = sbr.rel (%p130) target = $region20
        $region19: #{tpu_custom_call.1} parent=11 // pred_region
          %s134 = ssub.s32 2048, 2048
          %135 = vsyncadd [#allocation8], %s134
          %s136 = sshll.u32 [#allocation7], 4
          %s137 = int_to_ptr.vmem [resolvable:$true] %s136
          %142 = dma.hbm_to_vmem [thread:$0]  %s2, 2048, %s137, [#allocation8], 128, 128, 8
        $region20: #{tpu_custom_call.1} parent=11 // pred_fallthru
          _
        // Predicated region
        $region21: #{tpu_custom_call.1} parent=11 // pred_check
          %p143 = pneg %p78
        $region22: #{tpu_custom_call.1} parent=11 // pred_check_branch
          %145 = sbr.rel (%p143) target = $region24
        $region23: #{tpu_custom_call.1} parent=11 // pred_region
          _
        $region24: #{tpu_custom_call.1} parent=11 // pred_fallthru
          _
      $region12: #{tpu_custom_call.1} parent=5 // pred_fallthru
        _
      %p146 = scmp.lt.s32.totalorder %s15, 2
      // Predicated region
      $region25: #{tpu_custom_call.1} parent=5 // pred_check
        %p147 = pneg %p146
      $region26: #{tpu_custom_call.1} parent=5 // pred_check_branch
        %149 = sbr.rel (%p147) target = $region28
      $region27: #{tpu_custom_call.1} parent=5 // pred_region
        _
      $region28: #{tpu_custom_call.1} parent=5 // pred_fallthru
        _
      %p150 = scmp.le.s32.totalorder 1, %s15
      %p151 = scmp.lt.s32.totalorder %s15, 3
      %p152 = pnand %p150, %p151
      %p153 = pneg %p152
      // Predicated region
      $region29: #{tpu_custom_call.1} parent=5 // pred_check
        _
      $region30: #{tpu_custom_call.1} parent=5 // pred_check_branch
        %155 = sbr.rel (%p152) target = $region32
      $region31: #{tpu_custom_call.1} parent=5 // pred_region
        %s156 = ssub.s32 %s15, 1
        // Predicated region
        $region33: #{tpu_custom_call.1} parent=31 // pred_check
          %p157 = pneg %p36
        $region34: #{tpu_custom_call.1} parent=31 // pred_check_branch
          %159 = sbr.rel (%p157) target = $region36
        $region35: #{tpu_custom_call.1} parent=31 // pred_region
          %160 = dma.done [#allocation5], 64
        $region36: #{tpu_custom_call.1} parent=31 // pred_fallthru
          _
        // Predicated region
        $region37: #{tpu_custom_call.1} parent=31 // pred_check
          %p161 = pneg %p57
        $region38: #{tpu_custom_call.1} parent=31 // pred_check_branch
          %163 = sbr.rel (%p161) target = $region40
        $region39: #{tpu_custom_call.1} parent=31 // pred_region
          %164 = dma.done [#allocation8], 2048
        $region40: #{tpu_custom_call.1} parent=31 // pred_fallthru
          _
        %p165 = pneg %p36
        %p166 = pneg %p33
        %p167 = pneg %p57
        %p168 = pneg %p54
        %p169 = pneg %p78
        %p170 = pneg %p75
        %p171 = pneg %p104
        %p172 = pneg %p101
        %s173 = sand.u32 %s91, 1
        %s174 = scalar_lea.sflag [#allocation6], %s173
        %s175 = sand.u32 %s91, 1
        %s176 = smul.addr %s175, 8
        %s177 = scalar_lea.vmem [#allocation9], %s176
        %p178 = scmp.lt.s32.totalorder %s20, 0
        %s179 = ssub.s32 0, %s20
        %s180 = scalar_select %p178, %s179, %s20
        %s181 = sand.u32 %s180, 1
        %s182 = ssub.s32 0, %s181
        %s183 = scalar_select %p178, %s182, %s181
        %p184 = scmp.ne.s32.totalorder %s183, 0
        %p185 = scmp.lt.s32.totalorder %s183, 0
        %p186 = pnand %p185, %p184
        %p187 = pneg %p186
        %s188 = sadd.s32 %s183, 2
        %s189 = scalar_select %p187, %s188, %s183
        %p190 = scmp.eq.s32.totalorder %s20, 0
        // Predicated region
        $region41: #{tpu_custom_call.1} parent=31 // pred_check
          %p191 = pneg %p190
        $region42: #{tpu_custom_call.1} parent=31 // pred_check_branch
          %193 = sbr.rel (%p191) target = $region44
        $region43: #{tpu_custom_call.1} parent=31 // pred_region
          %194 = vst [vmem:[#allocation2] sm:$0xff] 0.0
          %195 = vst [vmem:[#allocation2 + $0x10] sm:$0x1] 0.0
          %s196 = scalar_lea.vmem [#allocation2], 24
          %197 = vst [vmem:[%s196] sm:$0xff] 0.0
          %198 = vst [vmem:[%s196 + $0x10] sm:$0x1] 0.0
          %s199 = scalar_lea.vmem [#allocation2], 8
          // Predicated region
          $region45: #{tpu_custom_call.1} parent=43 // pred_check
            _
          $region46: #{tpu_custom_call.1} parent=43 // pred_check_branch
            %201 = sbr.rel target = $region48
          $region47: #{tpu_custom_call.1} parent=43 // pred_region
            %202 = sst [smem:[#allocation12]] [#allocation11]
            %203 = sst [smem:[#allocation13]] [#allocation10]
          $region48: #{tpu_custom_call.1} parent=43 // pred_fallthru
            _
          %205 = shalt.err (0)
          %s207 = sshll.u32 %s199, 4
          %s208 = int_to_ptr.vmem [resolvable:$true] %s207
          %210 = dma.hbm_to_vmem [thread:$0]  %s0, 128, %s208, [#allocation3]
        $region44: #{tpu_custom_call.1} parent=31 // pred_fallthru
          _
        %s211 = scalar_lea.sflag [#allocation3], %s189
        %s212 = smul.u32 8, 1
        %s213 = sshll.u32 %s212, 4
        %214 = dma.done %s211, %s213
        %s215 = sadd.s32 %s20, 1
        %p216 = scmp.lt.s32.totalorder %s215, 2
        // Predicated region
        $region49: #{tpu_custom_call.1} parent=31 // pred_check
          %p217 = pneg %p216
        $region50: #{tpu_custom_call.1} parent=31 // pred_check_branch
          %219 = sbr.rel (%p217) target = $region52
        $region51: #{tpu_custom_call.1} parent=31 // pred_region
          %s220 = ssub.s32 1, %s189
          %s221 = smul.u32 %s215, 8
          %s222 = smul.addr %s221, 16
          %s223 = scalar_lea.hbm %s0, %s222
          %s224 = smul.u32 %s220, 24
          %s225 = sadd.s32 8, %s224
          %s226 = scalar_lea.vmem [#allocation2], %s225
          %s227 = scalar_lea.sflag [#allocation3], %s220
          // Predicated region
          $region53: #{tpu_custom_call.1} parent=51 // pred_check
            _
          $region54: #{tpu_custom_call.1} parent=51 // pred_check_branch
            %229 = sbr.rel target = $region56
          $region55: #{tpu_custom_call.1} parent=51 // pred_region
            %230 = sst [smem:[#allocation12]] [#allocation15]
            %231 = sst [smem:[#allocation13]] [#allocation14]
          $region56: #{tpu_custom_call.1} parent=51 // pred_fallthru
            _
          %233 = shalt.err (0)
          %s235 = sshll.u32 %s226, 4
          %s236 = int_to_ptr.vmem [resolvable:$true] %s235
          %238 = dma.hbm_to_vmem [thread:$0]  %s223, 128, %s236, %s227
        $region52: #{tpu_custom_call.1} parent=31 // pred_fallthru
          _
        %v239 = vld [vmem:[%s3] sm:$0x1]
        %s240 = smul.u32 %s189, 24
        %s241 = scalar_lea.vmem [#allocation2], %s240
        %v242 = vld [vmem:[%s241 + $0x7] sm:$0xff]
        %v243 = vld [vmem:[#allocation4] sm:$0x1]
        %v244 = vlaneseq
        %v245 = vshrl.u32 %v244, 7
        %v246 = vsub.s32 0, %v245
        %v247 = vrot.slane %v243, %v246
        %v248 = vmul.f32 %v242, %v247
        %v249 = vld [vmem:[%s241 + $0x8] sm:$0xff]
        %v250 = vld [vmem:[#allocation4 + $0x1] sm:$0x1]
        %v251 = vlaneseq
        %v252 = vshrl.u32 %v251, 7
        %v253 = vsub.s32 0, %v252
        %v254 = vrot.slane %v250, %v253
        %v255 = vmul.f32 %v249, %v254
        %v256 = vadd.f32 %v248, %v255
        %v257 = vld [vmem:[%s241 + $0x9] sm:$0xff]
        %v258 = vld [vmem:[#allocation4 + $0x2] sm:$0x1]
        %v259 = vlaneseq
        %v260 = vshrl.u32 %v259, 7
        %v261 = vsub.s32 0, %v260
        %v262 = vrot.slane %v258, %v261
        %v263 = vmul.f32 %v257, %v262
        %v264 = vadd.f32 %v256, %v263
        %v265 = vld [vmem:[#allocation7] sm:$0xff]
        %v266 = vld [vmem:[#allocation7 + $0x8] sm:$0xff]
        %v267 = vld [vmem:[#allocation7 + $0x10] sm:$0xff]
        %v268 = vld [vmem:[#allocation7 + $0x18] sm:$0xff]
        %v269 = vld [vmem:[#allocation7 + $0x20] sm:$0xff]
        %v270 = vld [vmem:[#allocation7 + $0x28] sm:$0xff]
        %v271 = vld [vmem:[#allocation7 + $0x30] sm:$0xff]
        %v272 = vld [vmem:[#allocation7 + $0x38] sm:$0xff]
        %v273 = vld [vmem:[#allocation7 + $0x40] sm:$0xff]
        %v274 = vld [vmem:[#allocation7 + $0x48] sm:$0xff]
        %v275 = vld [vmem:[#allocation7 + $0x50] sm:$0xff]
        %v276 = vld [vmem:[#allocation7 + $0x58] sm:$0xff]
        %v277 = vld [vmem:[#allocation7 + $0x60] sm:$0xff]
        %v278 = vld [vmem:[#allocation7 + $0x68] sm:$0xff]
        %v279 = vld [vmem:[#allocation7 + $0x70] sm:$0xff]
        %v280 = vld [vmem:[#allocation7 + $0x78] sm:$0xff]
        %v282 = vlaneseq
        %v283 = vshrl.u32 %v282, 7
        %v284 = vsub.s32 0, %v283
        %v285 = vrot.slane %v239, %v284
        %287 = vmatprep.subr.mxu0 0.0
        %288 = vmatpush1.msra.mxu0 %v280
        %289 = vmatprep.subr.mxu0 0.0
        %290 = vmatpush1.msra.mxu0 %v279
        %291 = vmatprep.subr.mxu0 0.0
        %292 = vmatpush1.msra.mxu0 %v278
        %293 = vmatprep.subr.mxu0 0.0
        %294 = vmatpush1.msra.mxu0 %v277
        %295 = vmatprep.subr.mxu0 0.0
        %296 = vmatpush1.msra.mxu0 %v276
        %297 = vmatprep.subr.mxu0 0.0
        %298 = vmatpush1.msra.mxu0 %v275
        %299 = vmatprep.subr.mxu0 0.0
        %300 = vmatpush1.msra.mxu0 %v274
        %301 = vmatprep.subr.mxu0 0.0
        %302 = vmatpush1.msra.mxu0 %v273
        %303 = vmatprep.subr.mxu0 0.0
        %304 = vmatpush1.msra.mxu0 %v272
        %305 = vmatprep.subr.mxu0 0.0
        %306 = vmatpush1.msra.mxu0 %v271
        %307 = vmatprep.subr.mxu0 0.0
        %308 = vmatpush1.msra.mxu0 %v270
        %309 = vmatprep.subr.mxu0 0.0
        %310 = vmatpush1.msra.mxu0 %v269
        %311 = vmatprep.subr.mxu0 0.0
        %312 = vmatpush1.msra.mxu0 %v268
        %313 = vmatprep.subr.mxu0 0.0
        %314 = vmatpush1.msra.mxu0 %v267
        %315 = vmatprep.subr.mxu0 0.0
        %316 = vmatpush1.msra.mxu0 %v266
        %317 = vmatprep.subr.mxu0 0.0
        %318 = vmatpush1.msra.mxu0 %v265
        %319 = vmatprep.subr.mxu0 0.0
        %320 = vmatpush2.msra.mxu0 0.0
        %321 = vmatprep.subr.mxu0 0.0
        %322 = vmatpush2.msra.mxu0 0.0
        %323 = vmatprep.subr.mxu0 0.0
        %324 = vmatpush2.msra.mxu0 0.0
        %325 = vmatprep.subr.mxu0 0.0
        %326 = vmatpush2.msra.mxu0 0.0
        %327 = vmatprep.subr.mxu0 0.0
        %328 = vmatpush2.msra.mxu0 0.0
        %329 = vmatprep.subr.mxu0 0.0
        %330 = vmatpush2.msra.mxu0 0.0
        %331 = vmatprep.subr.mxu0 0.0
        %332 = vmatpush2.msra.mxu0 0.0
        %333 = vmatprep.subr.mxu0 0.0
        %334 = vmatpush2.msra.mxu0 0.0
        %335 = vmatprep.subr.mxu0 0.0
        %336 = vmatpush2.msra.mxu0 0.0
        %337 = vmatprep.subr.mxu0 0.0
        %338 = vmatpush2.msra.mxu0 0.0
        %339 = vmatprep.subr.mxu0 0.0
        %340 = vmatpush2.msra.mxu0 0.0
        %341 = vmatprep.subr.mxu0 0.0
        %342 = vmatpush2.msra.mxu0 0.0
        %343 = vmatprep.subr.mxu0 0.0
        %344 = vmatpush2.msra.mxu0 0.0
        %345 = vmatprep.subr.mxu0 0.0
        %346 = vmatpush2.msra.mxu0 0.0
        %347 = vmatprep.subr.mxu0 0.0
        %348 = vmatpush2.msra.mxu0 0.0
        %349 = vmatprep.subr.mxu0 0.0
        %350 = vmatpush2.msra.mxu0 0.0
        %351 = vmatprep.mubr.f32.mxu0 0.0
        %352 = vmatmul.mubr.f32.gmra.mxu0 %v264
        %v353 = vpop.f32.mrf.mxu0
        %v354 = vadd.f32 %v285, %v353
        %v355 = vpop.f32.mrf.mxu0
        %356 = vdwg.mxu0
        %357 = vst [vmem:[%s177] sm:$0xff] %v354
        %s358 = sand.u32 %s91, 1
        %s359 = scalar_lea.sflag [#allocation6], %s358
        %s360 = sand.u32 %s91, 1
        %s361 = smul.addr %s360, 8
        %s362 = scalar_lea.vmem [#allocation9], %s361
        // Predicated region
        $region57: #{tpu_custom_call.1} parent=31 // pred_check
          %p363 = pneg %p101
        $region58: #{tpu_custom_call.1} parent=31 // pred_check_branch
          %365 = sbr.rel (%p363) target = $region60
        $region59: #{tpu_custom_call.1} parent=31 // pred_region
          %s367 = ssub.s32 128, 128
          %368 = vsyncadd %s359, %s367
          %s369 = smul.addr %s20, 128
          %s370 = scalar_lea.hbm %s4, %s369
          %s372 = sshll.u32 %s362, 4
          %s373 = int_to_ptr.vmem [resolvable:$true] %s372
          %375 = dma.vmem_to_hbm [thread:$0]  %s373, 128, %s370, %s359
        $region60: #{tpu_custom_call.1} parent=31 // pred_fallthru
          _
      $region32: #{tpu_custom_call.1} parent=5 // pred_fallthru
        _
      %p376 = scmp.le.s32.totalorder 2, %s15
      // Predicated region
      $region61: #{tpu_custom_call.1} parent=5 // pred_check
        %p377 = pneg %p376
      $region62: #{tpu_custom_call.1} parent=5 // pred_check_branch
        %379 = sbr.rel (%p377) target = $region64
      $region63: #{tpu_custom_call.1} parent=5 // pred_region
        %s380 = ssub.s32 %s15, 2
        // Predicated region
        $region65: #{tpu_custom_call.1} parent=63 // pred_check
          %p381 = pneg %p107
        $region66: #{tpu_custom_call.1} parent=63 // pred_check_branch
          %383 = sbr.rel (%p381) target = $region68
        $region67: #{tpu_custom_call.1} parent=63 // pred_region
          %s384 = sand.u32 %s92, 1
          %s385 = scalar_lea.sflag [#allocation6], %s384
          %s386 = sand.u32 %s92, 1
          %s387 = smul.addr %s386, 8
          %s388 = scalar_lea.vmem [#allocation9], %s387
          %389 = dma.done %s385, 128
        $region68: #{tpu_custom_call.1} parent=63 // pred_fallthru
          _
      $region64: #{tpu_custom_call.1} parent=5 // pred_fallthru
        _
    $region6: #{tpu_custom_call.1} parent=1 // loop_footer
      %s19 = sadd.s32 1, %s15
    $region7: #{tpu_custom_call.1} parent=1 // loop_footer_branch
      %14 = sbr.rel target = $region3
    $region8: #{tpu_custom_call.1} parent=1 // loop_exit
      _
    %390 = vsyncpa [#allocation5], 1
    %s391 = scalar_lea.sflag [#allocation5], 1
    %392 = vsyncpa %s391, 1
    %393 = vsyncpa [#allocation8], 1
    %394 = vsyncpa [#allocation6], 1
    %s395 = scalar_lea.sflag [#allocation6], 1
    %396 = vsyncpa %s395, 1
  %397 = vsyncmov [#allocation3]
  %s398 = vpop.sfrf %397
  %p399 = scmp.eq.s32.totalorder %s398, 0
  %p400 = pneg %p399
  %402 = shalt.err (%p400)
  %s403 = scalar_lea.sflag [#allocation3], 1
  %404 = vsyncmov %s403
  %s405 = vpop.sfrf %404
  %p406 = scmp.eq.s32.totalorder %s405, 0
  %p407 = pneg %p406
  %409 = shalt.err (%p407)

</llo_original>
